<compile_context>
chip_gen: v7x
topology: tpu7x:2x2x1
jax: 0.10.0
libtpu: 0.0.40
codegen_flags: <defaults>
</compile_context>

<pallas_src>
import functools

import jax
import jax.numpy as jnp
from jax.experimental import pallas as pl
from jax.experimental.pallas import tpu as pltpu


def _silu(x):
    return x * jax.nn.sigmoid(x)


def _round_up(a, m):
    return (a + m - 1) // m * m


def scorer_kernel(x_ref,
                  w1_ref, b1_ref,
                  w2_ref, b2_ref,
                  w3_ref, b3_ref,
                  w4_ref, b4_ref,
                  o_ref):
    """Fused transposed MLP.  x_ref: (D, T) bf16, o_ref: (1, T) f32."""
    xT = x_ref[...]                                                   # (D, T) bf16

    # Layer 1: (128, D) @ (D, T) -> (128, T), f32 accumulate, f32 SiLU.
    h = jnp.dot(w1_ref[...], xT, preferred_element_type=jnp.float32)
    h = _silu(h + b1_ref[...]).astype(jnp.bfloat16)                   # (128, T)

    # Layer 2: (32, 128) @ (128, T) -> (32, T).
    h = jnp.dot(w2_ref[...], h, preferred_element_type=jnp.float32)
    h = _silu(h + b2_ref[...])                                        # (32, T) f32

    # Layer 3: (8, 32) @ (32, T) -> (8, T); tiny, kept in f32.
    h = jnp.dot(w3_ref[...], h, preferred_element_type=jnp.float32)
    h = _silu(h + b3_ref[...])                                        # (8, T) f32

    # Layer 4 (8 -> 1) on VPU/XLU: broadcast multiply + sublane reduce.
    # Output stays lane-dense: one unmasked (1, T) store.
    out = jnp.sum(h * w4_ref[...], axis=0, keepdims=True) + b4_ref[...]
    o_ref[...] = out.astype(o_ref.dtype)


@functools.partial(jax.jit, static_argnames=("batch_tile",))
def scorer_forward(x, params, batch_tile=512):
    """x: (B, input_size) float32.  params: (in, out) weights + (1, out) biases."""
    B, D = x.shape
    compute_dtype = jnp.bfloat16

    # ---- choose the batch tile (lane dimension of the transposed problem) ----
    b_lanes = _round_up(B, 128)                 # lane-dense blocks need x128
    tile = min(batch_tile, b_lanes)
    if tile == b_lanes and b_lanes >= 256:
        # keep >=2 grid steps so v7x's two TensorCores both get work
        tile = _round_up(b_lanes // 2, 128)
    B_pad = _round_up(B, tile)
    grid = (B_pad // tile,)

    # ---- lay the problem out transposed: batch on the lane axis ----
    # Padded rows are zeros; they stay finite through SiLU and are sliced off
    # on the way out (no cross-row reduction happens in-kernel).
    xT = jnp.transpose(x).astype(compute_dtype)                       # (D, B)
    if B_pad != B:
        xT = jnp.pad(xT, ((0, 0), (0, B_pad - B)))

    # Weights as (out, in) so each layer is `w @ h`; biases as (out, 1).
    w1 = jnp.transpose(params["w1"]).astype(compute_dtype)            # (128, D) bf16
    w2 = jnp.transpose(params["w2"]).astype(compute_dtype)            # (32, 128) bf16
    w3 = jnp.transpose(params["w3"]).astype(jnp.float32)              # (8, 32)  f32
    b1 = jnp.transpose(params["b1"]).astype(jnp.float32)              # (128, 1)
    b2 = jnp.transpose(params["b2"]).astype(jnp.float32)              # (32, 1)
    b3 = jnp.transpose(params["b3"]).astype(jnp.float32)              # (8, 1)
    w4 = params["w4"].astype(jnp.float32)                             # (8, 1) - VPU path
    b4 = params["b4"].reshape(1, 1).astype(jnp.float32)               # (1, 1)

    def full_spec(arr):
        # Small parameters: give every grid step the full array.
        return pl.BlockSpec(arr.shape, lambda i: (0,) * arr.ndim)

    out = pl.pallas_call(
        scorer_kernel,
        out_shape=jax.ShapeDtypeStruct((1, B_pad), jnp.float32),
        grid_spec=pltpu.PrefetchScalarGridSpec(
            num_scalar_prefetch=0,
            grid=grid,
            in_specs=[
                pl.BlockSpec((D, tile), lambda i: (0, i)),            # x tile (lanes=batch)
                full_spec(w1), full_spec(b1),
                full_spec(w2), full_spec(b2),
                full_spec(w3), full_spec(b3),
                full_spec(w4), full_spec(b4),
            ],
            out_specs=pl.BlockSpec((1, tile), lambda i: (0, i)),      # lane-dense output
        ),
        compiler_params=pltpu.CompilerParams(
            dimension_semantics=("parallel",),
        ),
    )(xT, w1, b1, w2, b2, w3, b3, w4, b4)

    # (1, B_pad) -> (B, 1), dropping padded batch entries.
    return out.reshape(-1)[:B].reshape(B, 1).astype(x.dtype)


def init_scorer_params(key, input_size):
    """Deterministic init matching PyTorch nn.Linear default bounds.

    Weights stored as (in_features, out_features); biases as (1, out_features)."""
    dims = [(input_size, 128), (128, 32), (32, 8), (8, 1)]
    params = {}
    for idx, (fan_in, fan_out) in enumerate(dims, start=1):
        key, kw, kb = jax.random.split(key, 3)
        bound = 1.0 / jnp.sqrt(jnp.float32(fan_in))
        params[f"w{idx}"] = jax.random.uniform(
            kw, (fan_in, fan_out), jnp.float32, minval=-bound, maxval=bound)
        params[f"b{idx}"] = jax.random.uniform(
            kb, (1, fan_out), jnp.float32, minval=-bound, maxval=bound)
    return params


def scorer_reference(x, params):
    """Plain-JAX f32 reference for correctness checking."""
    h = _silu(x @ params["w1"] + params["b1"])
    h = _silu(h @ params["w2"] + params["b2"])
    h = _silu(h @ params["w3"] + params["b3"])
    return h @ params["w4"] + params["b4"]


if __name__ == "__main__":
    key = jax.random.PRNGKey(0)
    k_param, k_x = jax.random.split(key)

    input_size = 32
    batch = 200   # deliberately not a multiple of the tile: exercises padding path

    params = init_scorer_params(k_param, input_size)
    x = jax.random.normal(k_x, (batch, input_size), jnp.float32)

    out = scorer_forward(x, params)
    out = jax.block_until_ready(out)

    ref = scorer_reference(x, params)
    assert out.shape == (batch, 1), out.shape
    max_err = float(jnp.max(jnp.abs(out - ref)))
    # bf16 matmul inputs with f32 accumulation -> loose-ish tolerance.
    assert jnp.allclose(out, ref, atol=2e-2, rtol=2e-2), max_err

    print("KERNEL_OK")
</pallas_src>

<mosaic_0001>
module attributes {stable_mosaic.version = 11 : i64} {
  func.func @scorer_kernel(%arg0: i32, %arg1: memref<32x128xbf16, #tpu.memory_space<vmem>>, %arg2: memref<128x32xbf16, #tpu.memory_space<vmem>>, %arg3: memref<128x1xf32, #tpu.memory_space<vmem>>, %arg4: memref<32x128xbf16, #tpu.memory_space<vmem>>, %arg5: memref<32x1xf32, #tpu.memory_space<vmem>>, %arg6: memref<8x32xf32, #tpu.memory_space<vmem>>, %arg7: memref<8x1xf32, #tpu.memory_space<vmem>>, %arg8: memref<8x1xf32, #tpu.memory_space<vmem>>, %arg9: memref<1x1xf32, #tpu.memory_space<vmem>>, %arg10: memref<1x128xf32, #tpu.memory_space<vmem>>) attributes {dimension_semantics = [#tpu.dimension_semantics<parallel>], iteration_bounds = array<i64: 2>, scalar_prefetch = 0 : i64, scratch_operands = 0 : i64, tpu.core_type = #tpu.core_type<tc>, window_params = [{transform_indices = @transform_0, window_bounds = array<i64: 32, 128>}, {pipeline_mode = #tpu.pipeline_mode<synchronous>, transform_indices = @transform_1, window_bounds = array<i64: 128, 32>}, {pipeline_mode = #tpu.pipeline_mode<synchronous>, transform_indices = @transform_2, window_bounds = array<i64: 128, 1>}, {pipeline_mode = #tpu.pipeline_mode<synchronous>, transform_indices = @transform_3, window_bounds = array<i64: 32, 128>}, {pipeline_mode = #tpu.pipeline_mode<synchronous>, transform_indices = @transform_4, window_bounds = array<i64: 32, 1>}, {pipeline_mode = #tpu.pipeline_mode<synchronous>, transform_indices = @transform_5, window_bounds = array<i64: 8, 32>}, {pipeline_mode = #tpu.pipeline_mode<synchronous>, transform_indices = @transform_6, window_bounds = array<i64: 8, 1>}, {pipeline_mode = #tpu.pipeline_mode<synchronous>, transform_indices = @transform_7, window_bounds = array<i64: 8, 1>}, {pipeline_mode = #tpu.pipeline_mode<synchronous>, transform_indices = @transform_8, window_bounds = array<i64: 1, 1>}, {transform_indices = @transform_9, window_bounds = array<i64: 1, 128>}]} {
    %c0 = arith.constant 0 : index
    %c0_0 = arith.constant 0 : index
    %0 = vector.load %arg1[%c0, %c0_0] : memref<32x128xbf16, #tpu.memory_space<vmem>>, vector<32x128xbf16>
    %c0_1 = arith.constant 0 : index
    %c0_2 = arith.constant 0 : index
    %1 = vector.load %arg2[%c0_1, %c0_2] : memref<128x32xbf16, #tpu.memory_space<vmem>>, vector<128x32xbf16>
    %cst = arith.constant dense<0.000000e+00> : vector<128x128xf32>
    %2 = tpu.matmul %1, %0, %cst {dimension_numbers = #tpu.dot_dimension_numbers<[1], [0], [0], [1], [0, 0, 1, 1], [], []>} : vector<128x32xbf16>, vector<32x128xbf16>, vector<128x128xf32> -> vector<128x128xf32>
    %c0_3 = arith.constant 0 : index
    %c0_4 = arith.constant 0 : index
    %3 = vector.load %arg3[%c0_3, %c0_4] : memref<128x1xf32, #tpu.memory_space<vmem>>, vector<128x1xf32>
    %4 = vector.broadcast %3 : vector<128x1xf32> to vector<128x128xf32>
    %5 = arith.addf %2, %4 : vector<128x128xf32>
    %6 = arith.negf %5 : vector<128x128xf32>
    %7 = math.exp %6 : vector<128x128xf32>
    %cst_5 = arith.constant 1.000000e+00 : f32
    %8 = vector.broadcast %cst_5 : f32 to vector<128x128xf32>
    %9 = arith.addf %8, %7 : vector<128x128xf32>
    %10 = arith.divf %8, %9 : vector<128x128xf32>
    %11 = arith.mulf %5, %10 : vector<128x128xf32>
    %12 = arith.truncf %11 : vector<128x128xf32> to vector<128x128xbf16>
    %c0_6 = arith.constant 0 : index
    %c0_7 = arith.constant 0 : index
    %13 = vector.load %arg4[%c0_6, %c0_7] : memref<32x128xbf16, #tpu.memory_space<vmem>>, vector<32x128xbf16>
    %cst_8 = arith.constant dense<0.000000e+00> : vector<32x128xf32>
    %14 = tpu.matmul %13, %12, %cst_8 {dimension_numbers = #tpu.dot_dimension_numbers<[1], [0], [0], [1], [0, 0, 1, 1], [], []>} : vector<32x128xbf16>, vector<128x128xbf16>, vector<32x128xf32> -> vector<32x128xf32>
    %c0_9 = arith.constant 0 : index
    %c0_10 = arith.constant 0 : index
    %15 = vector.load %arg5[%c0_9, %c0_10] : memref<32x1xf32, #tpu.memory_space<vmem>>, vector<32x1xf32>
    %16 = vector.broadcast %15 : vector<32x1xf32> to vector<32x128xf32>
    %17 = arith.addf %14, %16 : vector<32x128xf32>
    %18 = arith.negf %17 : vector<32x128xf32>
    %19 = math.exp %18 : vector<32x128xf32>
    %cst_11 = arith.constant 1.000000e+00 : f32
    %20 = vector.broadcast %cst_11 : f32 to vector<32x128xf32>
    %21 = arith.addf %20, %19 : vector<32x128xf32>
    %22 = arith.divf %20, %21 : vector<32x128xf32>
    %23 = arith.mulf %17, %22 : vector<32x128xf32>
    %c0_12 = arith.constant 0 : index
    %c0_13 = arith.constant 0 : index
    %24 = vector.load %arg6[%c0_12, %c0_13] : memref<8x32xf32, #tpu.memory_space<vmem>>, vector<8x32xf32>
    %cst_14 = arith.constant dense<0.000000e+00> : vector<8x128xf32>
    %25 = tpu.matmul %24, %23, %cst_14 {dimension_numbers = #tpu.dot_dimension_numbers<[1], [0], [0], [1], [0, 0, 1, 1], [], []>} : vector<8x32xf32>, vector<32x128xf32>, vector<8x128xf32> -> vector<8x128xf32>
    %c0_15 = arith.constant 0 : index
    %c0_16 = arith.constant 0 : index
    %26 = vector.load %arg7[%c0_15, %c0_16] : memref<8x1xf32, #tpu.memory_space<vmem>>, vector<8x1xf32>
    %27 = vector.broadcast %26 : vector<8x1xf32> to vector<8x128xf32>
    %28 = arith.addf %25, %27 : vector<8x128xf32>
    %29 = arith.negf %28 : vector<8x128xf32>
    %30 = math.exp %29 : vector<8x128xf32>
    %cst_17 = arith.constant 1.000000e+00 : f32
    %31 = vector.broadcast %cst_17 : f32 to vector<8x128xf32>
    %32 = arith.addf %31, %30 : vector<8x128xf32>
    %33 = arith.divf %31, %32 : vector<8x128xf32>
    %34 = arith.mulf %28, %33 : vector<8x128xf32>
    %c0_18 = arith.constant 0 : index
    %c0_19 = arith.constant 0 : index
    %35 = vector.load %arg8[%c0_18, %c0_19] : memref<8x1xf32, #tpu.memory_space<vmem>>, vector<8x1xf32>
    %36 = vector.broadcast %35 : vector<8x1xf32> to vector<8x128xf32>
    %37 = arith.mulf %34, %36 : vector<8x128xf32>
    %cst_20 = arith.constant dense<0.000000e+00> : vector<128xf32>
    %38 = vector.multi_reduction <add>, %37, %cst_20 [0] : vector<8x128xf32> to vector<128xf32>
    %39 = vector.shape_cast %38 : vector<128xf32> to vector<1x128xf32>
    %c0_21 = arith.constant 0 : index
    %c0_22 = arith.constant 0 : index
    %40 = vector.load %arg9[%c0_21, %c0_22] : memref<1x1xf32, #tpu.memory_space<vmem>>, vector<1x1xf32>
    %41 = vector.broadcast %40 : vector<1x1xf32> to vector<1x128xf32>
    %42 = arith.addf %39, %41 : vector<1x128xf32>
    %c0_23 = arith.constant 0 : index
    %c0_24 = arith.constant 0 : index
    %43 = vector.load %arg10[%c0_23, %c0_24] : memref<1x128xf32, #tpu.memory_space<vmem>>, vector<1x128xf32>
    tpu.vector_store %arg10[%c0_23, %c0_24], %42 {strides = array<i32>} : memref<1x128xf32, #tpu.memory_space<vmem>>, vector<1x128xf32>,
    return
  }
  func.func @transform_0(%arg0: i32) -> (i32, i32) {
    %c0_i32 = arith.constant 0 : i32
    %c0_i32_0 = arith.constant 0 : i32
    return %c0_i32, %arg0 : i32, i32
  }
  func.func @transform_1(%arg0: i32) -> (i32, i32) {
    %c0_i32 = arith.constant 0 : i32
    %c0_i32_0 = arith.constant 0 : i32
    %c0_i32_1 = arith.constant 0 : i32
    return %c0_i32, %c0_i32_0 : i32, i32
  }
  func.func @transform_2(%arg0: i32) -> (i32, i32) {
    %c0_i32 = arith.constant 0 : i32
    %c0_i32_0 = arith.constant 0 : i32
    %c0_i32_1 = arith.constant 0 : i32
    return %c0_i32, %c0_i32_0 : i32, i32
  }
  func.func @transform_3(%arg0: i32) -> (i32, i32) {
    %c0_i32 = arith.constant 0 : i32
    %c0_i32_0 = arith.constant 0 : i32
    %c0_i32_1 = arith.constant 0 : i32
    return %c0_i32, %c0_i32_0 : i32, i32
  }
  func.func @transform_4(%arg0: i32) -> (i32, i32) {
    %c0_i32 = arith.constant 0 : i32
    %c0_i32_0 = arith.constant 0 : i32
    %c0_i32_1 = arith.constant 0 : i32
    return %c0_i32, %c0_i32_0 : i32, i32
  }
  func.func @transform_5(%arg0: i32) -> (i32, i32) {
    %c0_i32 = arith.constant 0 : i32
    %c0_i32_0 = arith.constant 0 : i32
    %c0_i32_1 = arith.constant 0 : i32
    return %c0_i32, %c0_i32_0 : i32, i32
  }
  func.func @transform_6(%arg0: i32) -> (i32, i32) {
    %c0_i32 = arith.constant 0 : i32
    %c0_i32_0 = arith.constant 0 : i32
    %c0_i32_1 = arith.constant 0 : i32
    return %c0_i32, %c0_i32_0 : i32, i32
  }
  func.func @transform_7(%arg0: i32) -> (i32, i32) {
    %c0_i32 = arith.constant 0 : i32
    %c0_i32_0 = arith.constant 0 : i32
    %c0_i32_1 = arith.constant 0 : i32
    return %c0_i32, %c0_i32_0 : i32, i32
  }
  func.func @transform_8(%arg0: i32) -> (i32, i32) {
    %c0_i32 = arith.constant 0 : i32
    %c0_i32_0 = arith.constant 0 : i32
    %c0_i32_1 = arith.constant 0 : i32
    return %c0_i32, %c0_i32_0 : i32, i32
  }
  func.func @transform_9(%arg0: i32) -> (i32, i32) {
    %c0_i32 = arith.constant 0 : i32
    %c0_i32_0 = arith.constant 0 : i32
    return %c0_i32, %arg0 : i32, i32
  }
}

</mosaic_0001>

<llo_original>
// kernel: scorer_forward.1
$region0: #{scorer_forward.1}
  #allocation0 [shape = 'u32[]', space=smem, size = 0x4, offset = 0x4, fixed_abs, tag = 'smem constant byte address 0x4 - core index']
  #allocation1 [shape = 'u32[144,128]{1,0:T(1,128)}', space=vmem, size = 0x12000, scoped, tag = 'internal scratch']
  #allocation2 [shape = 'f32[1,1]{1,0:T(1,128)S(1)}', space=vmem, size = 0x200, scoped, tag = 'scoped memory for scorer_forward.1']
  %s0 = inlined_call_operand.vmem [shape: bf16[32,256], index: 0, kind: input, shape index: {}]
  %s1 = inlined_call_operand.vmem [shape: bf16[128,32], index: 1, kind: input, shape index: {}]
  %s2 = inlined_call_operand.vmem [shape: f32[128,1], index: 2, kind: input, shape index: {}]
  %s3 = inlined_call_operand.vmem [shape: bf16[32,128], index: 3, kind: input, shape index: {}]
  %s4 = inlined_call_operand.vmem [shape: f32[32,1], index: 4, kind: input, shape index: {}]
  %s5 = inlined_call_operand.vmem [shape: f32[8,32], index: 5, kind: input, shape index: {}]
  %s6 = inlined_call_operand.vmem [shape: f32[8,1], index: 6, kind: input, shape index: {}]
  %s7 = inlined_call_operand.vmem [shape: f32[8,1], index: 7, kind: input, shape index: {}]
  %s8 = inlined_call_operand.<no memory space> [shape: f32[1,1], index: 8, kind: input, shape index: {}]
  %s9 = inlined_call_operand.vmem [shape: f32[1,256], index: 9, kind: output, shape index: {}]
  %s10 = sld [smem:[#allocation0]]
  $region110: #{scorer_forward.1} parent=0
    _
  %s12 = ssub.s32 1, %s10
  %s13 = scalar_select 0, %s12, %s10
  %v14 = vstv %s8
  %15 = vst [vmem:[#allocation2] sm:$0x1] %v14
  $region1: #{scorer_forward.1} parent=0
    #allocation3 [shape = 'u8[16384]{0}', space=vmem, size = 0x4000, scoped, tag = 'input window, operand 0']
    loop: start=0, step=1, limit=4
    $region2: #{scorer_forward.1} parent=1 // loop_pre_header
      _
    $region3: #{scorer_forward.1} parent=1 // loop_header
      %s17 = sphi 0, %s21
      %p18 = scmp.ge.s32.totalorder %s17, 4
      %s27 = sphi 0, %s29
      %s30 = sphi 0, %s27
      %s31 = sphi 0, %s30
      %s47 = sphi 0, %s31
      %s51 = sphi 0, %s51
      %s53 = sphi 0, %s51
      %s54 = sphi 0, %s53
      %s68 = sphi 0, %s54
      %s72 = sphi 0, %s72
      %s74 = sphi 0, %s72
      %s75 = sphi 0, %s74
      %s89 = sphi 0, %s75
      %s93 = sphi 0, %s93
      %s95 = sphi 0, %s93
      %s96 = sphi 0, %s95
      %s110 = sphi 0, %s96
      %s114 = sphi 0, %s114
      %s116 = sphi 0, %s114
      %s117 = sphi 0, %s116
      %s131 = sphi 0, %s117
      %s135 = sphi 0, %s135
      %s137 = sphi 0, %s135
      %s138 = sphi 0, %s137
      %s152 = sphi 0, %s138
      %s156 = sphi 0, %s156
      %s158 = sphi 0, %s156
      %s159 = sphi 0, %s158
      %s173 = sphi 0, %s159
      %s177 = sphi 0, %s177
      %s179 = sphi 0, %s177
      %s180 = sphi 0, %s179
      %s194 = sphi 0, %s180
      %s198 = sphi 0, %s198
      %s200 = sphi 0, %s198
      %s201 = sphi 0, %s200
      %s215 = sphi 0, %s201
      %s221 = sphi 0, %s223
      %s224 = sphi 0, %s221
      %s225 = sphi 0, %s224
      %s241 = sphi 0, %s225
    $region4: #{scorer_forward.1} parent=1 // loop_header_branch
      %20 = sbr.rel (%p18) target = $region8
    $region5: #{scorer_forward.1} parent=1 // loop_body
      %s22 = ssub.s32 %s17, 1
      %s23 = ssub.s32 %s17, 2
      %s24 = sadd.s32 %s17, 1
      %s25 = ssub.s32 %s17, %s24
      %p26 = scmp.eq.s32.totalorder %s25, 0
      %s28 = sadd.s32 %s27, 1
      %s29 = scalar_select %p26, %s27, %s28
      %p32 = pneg %p26
      %p33 = scmp.eq.s32.totalorder %s17, 1
      %p34 = por %p32, %p33
      %p35 = scmp.ne.s32.totalorder %s27, %s30
      %p36 = scmp.eq.s32.totalorder %s17, 0
      %p37 = por %p35, %p36
      %p38 = scmp.ne.s32.totalorder %s27, %s30
      %p39 = scmp.eq.s32.totalorder %s22, 1
      %p40 = por %p38, %p39
      %p41 = scmp.ne.s32.totalorder %s30, %s31
      %p42 = scmp.eq.s32.totalorder %s22, 0
      %p43 = por %p41, %p42
      %p44 = scmp.ne.s32.totalorder %s30, %s31
      %p45 = scmp.eq.s32.totalorder %s23, 1
      %p46 = por %p44, %p45
      %p48 = scmp.ne.s32.totalorder %s31, %s47
      %p49 = scmp.eq.s32.totalorder %s23, 0
      %p50 = por %p48, %p49
      %s52 = sadd.s32 %s51, 1
      %p55 = scmp.eq.s32.totalorder %s17, 1
      %p56 = scmp.ne.s32.totalorder %s51, %s53
      %p57 = scmp.eq.s32.totalorder %s17, 0
      %p58 = por %p56, %p57
      %p59 = scmp.ne.s32.totalorder %s51, %s53
      %p60 = scmp.eq.s32.totalorder %s22, 1
      %p61 = por %p59, %p60
      %p62 = scmp.ne.s32.totalorder %s53, %s54
      %p63 = scmp.eq.s32.totalorder %s22, 0
      %p64 = por %p62, %p63
      %p65 = scmp.ne.s32.totalorder %s53, %s54
      %p66 = scmp.eq.s32.totalorder %s23, 1
      %p67 = por %p65, %p66
      %p69 = scmp.ne.s32.totalorder %s54, %s68
      %p70 = scmp.eq.s32.totalorder %s23, 0
      %p71 = por %p69, %p70
      %s73 = sadd.s32 %s72, 1
      %p76 = scmp.eq.s32.totalorder %s17, 1
      %p77 = scmp.ne.s32.totalorder %s72, %s74
      %p78 = scmp.eq.s32.totalorder %s17, 0
      %p79 = por %p77, %p78
      %p80 = scmp.ne.s32.totalorder %s72, %s74
      %p81 = scmp.eq.s32.totalorder %s22, 1
      %p82 = por %p80, %p81
      %p83 = scmp.ne.s32.totalorder %s74, %s75
      %p84 = scmp.eq.s32.totalorder %s22, 0
      %p85 = por %p83, %p84
      %p86 = scmp.ne.s32.totalorder %s74, %s75
      %p87 = scmp.eq.s32.totalorder %s23, 1
      %p88 = por %p86, %p87
      %p90 = scmp.ne.s32.totalorder %s75, %s89
      %p91 = scmp.eq.s32.totalorder %s23, 0
      %p92 = por %p90, %p91
      %s94 = sadd.s32 %s93, 1
      %p97 = scmp.eq.s32.totalorder %s17, 1
      %p98 = scmp.ne.s32.totalorder %s93, %s95
      %p99 = scmp.eq.s32.totalorder %s17, 0
      %p100 = por %p98, %p99
      %p101 = scmp.ne.s32.totalorder %s93, %s95
      %p102 = scmp.eq.s32.totalorder %s22, 1
      %p103 = por %p101, %p102
      %p104 = scmp.ne.s32.totalorder %s95, %s96
      %p105 = scmp.eq.s32.totalorder %s22, 0
      %p106 = por %p104, %p105
      %p107 = scmp.ne.s32.totalorder %s95, %s96
      %p108 = scmp.eq.s32.totalorder %s23, 1
      %p109 = por %p107, %p108
      %p111 = scmp.ne.s32.totalorder %s96, %s110
      %p112 = scmp.eq.s32.totalorder %s23, 0
      %p113 = por %p111, %p112
      %s115 = sadd.s32 %s114, 1
      %p118 = scmp.eq.s32.totalorder %s17, 1
      %p119 = scmp.ne.s32.totalorder %s114, %s116
      %p120 = scmp.eq.s32.totalorder %s17, 0
      %p121 = por %p119, %p120
      %p122 = scmp.ne.s32.totalorder %s114, %s116
      %p123 = scmp.eq.s32.totalorder %s22, 1
      %p124 = por %p122, %p123
      %p125 = scmp.ne.s32.totalorder %s116, %s117
      %p126 = scmp.eq.s32.totalorder %s22, 0
      %p127 = por %p125, %p126
      %p128 = scmp.ne.s32.totalorder %s116, %s117
      %p129 = scmp.eq.s32.totalorder %s23, 1
      %p130 = por %p128, %p129
      %p132 = scmp.ne.s32.totalorder %s117, %s131
      %p133 = scmp.eq.s32.totalorder %s23, 0
      %p134 = por %p132, %p133
      %s136 = sadd.s32 %s135, 1
      %p139 = scmp.eq.s32.totalorder %s17, 1
      %p140 = scmp.ne.s32.totalorder %s135, %s137
      %p141 = scmp.eq.s32.totalorder %s17, 0
      %p142 = por %p140, %p141
      %p143 = scmp.ne.s32.totalorder %s135, %s137
      %p144 = scmp.eq.s32.totalorder %s22, 1
      %p145 = por %p143, %p144
      %p146 = scmp.ne.s32.totalorder %s137, %s138
      %p147 = scmp.eq.s32.totalorder %s22, 0
      %p148 = por %p146, %p147
      %p149 = scmp.ne.s32.totalorder %s137, %s138
      %p150 = scmp.eq.s32.totalorder %s23, 1
      %p151 = por %p149, %p150
      %p153 = scmp.ne.s32.totalorder %s138, %s152
      %p154 = scmp.eq.s32.totalorder %s23, 0
      %p155 = por %p153, %p154
      %s157 = sadd.s32 %s156, 1
      %p160 = scmp.eq.s32.totalorder %s17, 1
      %p161 = scmp.ne.s32.totalorder %s156, %s158
      %p162 = scmp.eq.s32.totalorder %s17, 0
      %p163 = por %p161, %p162
      %p164 = scmp.ne.s32.totalorder %s156, %s158
      %p165 = scmp.eq.s32.totalorder %s22, 1
      %p166 = por %p164, %p165
      %p167 = scmp.ne.s32.totalorder %s158, %s159
      %p168 = scmp.eq.s32.totalorder %s22, 0
      %p169 = por %p167, %p168
      %p170 = scmp.ne.s32.totalorder %s158, %s159
      %p171 = scmp.eq.s32.totalorder %s23, 1
      %p172 = por %p170, %p171
      %p174 = scmp.ne.s32.totalorder %s159, %s173
      %p175 = scmp.eq.s32.totalorder %s23, 0
      %p176 = por %p174, %p175
      %s178 = sadd.s32 %s177, 1
      %p181 = scmp.eq.s32.totalorder %s17, 1
      %p182 = scmp.ne.s32.totalorder %s177, %s179
      %p183 = scmp.eq.s32.totalorder %s17, 0
      %p184 = por %p182, %p183
      %p185 = scmp.ne.s32.totalorder %s177, %s179
      %p186 = scmp.eq.s32.totalorder %s22, 1
      %p187 = por %p185, %p186
      %p188 = scmp.ne.s32.totalorder %s179, %s180
      %p189 = scmp.eq.s32.totalorder %s22, 0
      %p190 = por %p188, %p189
      %p191 = scmp.ne.s32.totalorder %s179, %s180
      %p192 = scmp.eq.s32.totalorder %s23, 1
      %p193 = por %p191, %p192
      %p195 = scmp.ne.s32.totalorder %s180, %s194
      %p196 = scmp.eq.s32.totalorder %s23, 0
      %p197 = por %p195, %p196
      %s199 = sadd.s32 %s198, 1
      %p202 = scmp.eq.s32.totalorder %s17, 1
      %p203 = scmp.ne.s32.totalorder %s198, %s200
      %p204 = scmp.eq.s32.totalorder %s17, 0
      %p205 = por %p203, %p204
      %p206 = scmp.ne.s32.totalorder %s198, %s200
      %p207 = scmp.eq.s32.totalorder %s22, 1
      %p208 = por %p206, %p207
      %p209 = scmp.ne.s32.totalorder %s200, %s201
      %p210 = scmp.eq.s32.totalorder %s22, 0
      %p211 = por %p209, %p210
      %p212 = scmp.ne.s32.totalorder %s200, %s201
      %p213 = scmp.eq.s32.totalorder %s23, 1
      %p214 = por %p212, %p213
      %p216 = scmp.ne.s32.totalorder %s201, %s215
      %p217 = scmp.eq.s32.totalorder %s23, 0
      %p218 = por %p216, %p217
      %s219 = ssub.s32 %s17, %s24
      %p220 = scmp.eq.s32.totalorder %s219, 0
      %s222 = sadd.s32 %s221, 1
      %s223 = scalar_select %p220, %s221, %s222
      %p226 = pneg %p220
      %p227 = scmp.eq.s32.totalorder %s17, 1
      %p228 = por %p226, %p227
      %p229 = scmp.ne.s32.totalorder %s221, %s224
      %p230 = scmp.eq.s32.totalorder %s17, 0
      %p231 = por %p229, %p230
      %p232 = scmp.ne.s32.totalorder %s221, %s224
      %p233 = scmp.eq.s32.totalorder %s22, 1
      %p234 = por %p232, %p233
      %p235 = scmp.ne.s32.totalorder %s224, %s225
      %p236 = scmp.eq.s32.totalorder %s22, 0
      %p237 = por %p235, %p236
      %p238 = scmp.ne.s32.totalorder %s224, %s225
      %p239 = scmp.eq.s32.totalorder %s23, 1
      %p240 = por %p238, %p239
      %p242 = scmp.ne.s32.totalorder %s225, %s241
      %p243 = scmp.eq.s32.totalorder %s23, 0
      %p244 = por %p242, %p243
      %p245 = scmp.le.s32.totalorder 1, %s17
      %p246 = scmp.lt.s32.totalorder %s17, 3
      %p247 = pnand %p245, %p246
      %p248 = pneg %p247
      // Predicated region
      $region9: #{scorer_forward.1} parent=5 // pred_check
        _
      $region10: #{scorer_forward.1} parent=5 // pred_check_branch
        %250 = sbr.rel (%p247) target = $region12
      $region11: #{scorer_forward.1} parent=5 // pred_region
        %s251 = ssub.s32 %s17, 1
        // Predicated region
        $region13: #{scorer_forward.1} parent=11 // pred_check
          %p252 = pneg %p64
        $region14: #{scorer_forward.1} parent=11 // pred_check_branch
          %254 = sbr.rel (%p252) target = $region16
        $region15: #{scorer_forward.1} parent=11 // pred_region
          _
        $region16: #{scorer_forward.1} parent=11 // pred_fallthru
          _
        // Predicated region
        $region17: #{scorer_forward.1} parent=11 // pred_check
          %p255 = pneg %p85
        $region18: #{scorer_forward.1} parent=11 // pred_check_branch
          %257 = sbr.rel (%p255) target = $region20
        $region19: #{scorer_forward.1} parent=11 // pred_region
          _
        $region20: #{scorer_forward.1} parent=11 // pred_fallthru
          _
        // Predicated region
        $region21: #{scorer_forward.1} parent=11 // pred_check
          %p258 = pneg %p106
        $region22: #{scorer_forward.1} parent=11 // pred_check_branch
          %260 = sbr.rel (%p258) target = $region24
        $region23: #{scorer_forward.1} parent=11 // pred_region
          _
        $region24: #{scorer_forward.1} parent=11 // pred_fallthru
          _
        // Predicated region
        $region25: #{scorer_forward.1} parent=11 // pred_check
          %p261 = pneg %p127
        $region26: #{scorer_forward.1} parent=11 // pred_check_branch
          %263 = sbr.rel (%p261) target = $region28
        $region27: #{scorer_forward.1} parent=11 // pred_region
          _
        $region28: #{scorer_forward.1} parent=11 // pred_fallthru
          _
        // Predicated region
        $region29: #{scorer_forward.1} parent=11 // pred_check
          %p264 = pneg %p148
        $region30: #{scorer_forward.1} parent=11 // pred_check_branch
          %266 = sbr.rel (%p264) target = $region32
        $region31: #{scorer_forward.1} parent=11 // pred_region
          _
        $region32: #{scorer_forward.1} parent=11 // pred_fallthru
          _
        // Predicated region
        $region33: #{scorer_forward.1} parent=11 // pred_check
          %p267 = pneg %p169
        $region34: #{scorer_forward.1} parent=11 // pred_check_branch
          %269 = sbr.rel (%p267) target = $region36
        $region35: #{scorer_forward.1} parent=11 // pred_region
          _
        $region36: #{scorer_forward.1} parent=11 // pred_fallthru
          _
        // Predicated region
        $region37: #{scorer_forward.1} parent=11 // pred_check
          %p270 = pneg %p190
        $region38: #{scorer_forward.1} parent=11 // pred_check_branch
          %272 = sbr.rel (%p270) target = $region40
        $region39: #{scorer_forward.1} parent=11 // pred_region
          _
        $region40: #{scorer_forward.1} parent=11 // pred_fallthru
          _
        // Predicated region
        $region41: #{scorer_forward.1} parent=11 // pred_check
          %p273 = pneg %p211
        $region42: #{scorer_forward.1} parent=11 // pred_check_branch
          %275 = sbr.rel (%p273) target = $region44
        $region43: #{scorer_forward.1} parent=11 // pred_region
          _
        $region44: #{scorer_forward.1} parent=11 // pred_fallthru
          _
      $region12: #{scorer_forward.1} parent=5 // pred_fallthru
        _
      %p276 = scmp.lt.s32.totalorder %s17, 2
      // Predicated region
      $region45: #{scorer_forward.1} parent=5 // pred_check
        %p277 = pneg %p276
      $region46: #{scorer_forward.1} parent=5 // pred_check_branch
        %279 = sbr.rel (%p277) target = $region48
      $region47: #{scorer_forward.1} parent=5 // pred_region
        // Predicated region
        $region49: #{scorer_forward.1} parent=47 // pred_check
          %p280 = pneg %p37
        $region50: #{scorer_forward.1} parent=47 // pred_check_branch
          %282 = sbr.rel (%p280) target = $region52
        $region51: #{scorer_forward.1} parent=47 // pred_region
          %s283 = sand.u32 %s27, 1
          %s284 = sand.u32 %s27, 1
          %s285 = smul.addr %s284, 16
          %s286 = scalar_lea.vmem [#allocation3], %s285
          %s287 = smul.addr %s17, 4
          %s288 = scalar_lea.vmem %s0, %s287
          // Predicated region
          $region53: #{scorer_forward.1} parent=51 // pred_check
            _
          $region54: #{scorer_forward.1} parent=51 // pred_check_branch
            %290 = sbr.rel (0) target = $region56
          $region55: #{scorer_forward.1} parent=51 // pred_region
            // Predicated region
            $region57: #{scorer_forward.1} parent=55 // pred_check
              _
            $region58: #{scorer_forward.1} parent=55 // pred_check_branch
              %292 = sbr.rel target = $region60
            $region59: #{scorer_forward.1} parent=55 // pred_region
              // Predicated region
              $region72: #{scorer_forward.1} parent=59 // pred_check
                _
              $region73: #{scorer_forward.1} parent=59 // pred_check_branch
                %313 = sbr.rel (0) target = $region75
              $region74: #{scorer_forward.1} parent=59 // pred_region
                loop: start=0, step=1, limit=1
                $region76: #{scorer_forward.1} parent=74 // loop_pre_header
                  _
                $region77: #{scorer_forward.1} parent=74 // loop_header
                  %s315 = sphi 0, %s319
                  %p316 = scmp.ge.s32.totalorder %s315, 1
                  %s320 = sphi %s288, %s288
                  %s321 = sphi %s286, %s286
                $region78: #{scorer_forward.1} parent=74 // loop_header_branch
                  %318 = sbr.rel (%p316) target = $region82
                $region79: #{scorer_forward.1} parent=74 // loop_body
                  _
                $region80: #{scorer_forward.1} parent=74 // loop_footer
                  %s319 = sadd.s32 1, %s315
                $region81: #{scorer_forward.1} parent=74 // loop_footer_branch
                  %314 = sbr.rel target = $region77
                $region82: #{scorer_forward.1} parent=74 // loop_exit
                  _
                loop: start=0, step=1, limit=1
                $region83: #{scorer_forward.1} parent=74 // loop_pre_header
                  _
                $region84: #{scorer_forward.1} parent=74 // loop_header
                  %s324 = sphi 0, %s328
                  %p325 = scmp.ge.s32.totalorder %s324, 1
                  %s329 = sphi %s288, %s288
                  %s330 = sphi %s286, %s286
                $region85: #{scorer_forward.1} parent=74 // loop_header_branch
                  %327 = sbr.rel (%p325) target = $region89
                $region86: #{scorer_forward.1} parent=74 // loop_body
                  %v331 = vld [vmem:[%s329] sm:$0xf]
                  %332 = vst [vmem:[%s330] sm:$0xf] %v331
                  %v333 = vld [vmem:[%s329 + $0x8] sm:$0xf]
                  %334 = vst [vmem:[%s330 + $0x4] sm:$0xf] %v333
                  %v335 = vld [vmem:[%s329 + $0x10] sm:$0xf]
                  %336 = vst [vmem:[%s330 + $0x8] sm:$0xf] %v335
                  %v337 = vld [vmem:[%s329 + $0x18] sm:$0xf]
                  %338 = vst [vmem:[%s330 + $0xc] sm:$0xf] %v337
                $region87: #{scorer_forward.1} parent=74 // loop_footer
                  %s328 = sadd.s32 1, %s324
                $region88: #{scorer_forward.1} parent=74 // loop_footer_branch
                  %323 = sbr.rel target = $region84
                $region89: #{scorer_forward.1} parent=74 // loop_exit
                  _
              $region75: #{scorer_forward.1} parent=59 // pred_fallthru
                _
            $region60: #{scorer_forward.1} parent=55 // pred_fallthru
              _
            // Predicated region
            $region61: #{scorer_forward.1} parent=55 // pred_check
              _
            $region62: #{scorer_forward.1} parent=55 // pred_check_branch
              %294 = sbr.rel (0) target = $region64
            $region63: #{scorer_forward.1} parent=55 // pred_region
              loop: start=0, step=1, limit=1
              $region65: #{scorer_forward.1} parent=63 // loop_pre_header
                _
              $region66: #{scorer_forward.1} parent=63 // loop_header
                %s297 = sphi 0, %s301
                %p298 = scmp.ge.s32.totalorder %s297, 1
                %s302 = sphi %s288, %s288
                %s303 = sphi %s286, %s286
              $region67: #{scorer_forward.1} parent=63 // loop_header_branch
                %300 = sbr.rel (%p298) target = $region71
              $region68: #{scorer_forward.1} parent=63 // loop_body
                %v304 = vld [vmem:[%s302] sm:$0xf]
                %305 = vst [vmem:[%s303] sm:$0xf] %v304
                %v306 = vld [vmem:[%s302 + $0x8] sm:$0xf]
                %307 = vst [vmem:[%s303 + $0x4] sm:$0xf] %v306
                %v308 = vld [vmem:[%s302 + $0x10] sm:$0xf]
                %309 = vst [vmem:[%s303 + $0x8] sm:$0xf] %v308
                %v310 = vld [vmem:[%s302 + $0x18] sm:$0xf]
                %311 = vst [vmem:[%s303 + $0xc] sm:$0xf] %v310
              $region69: #{scorer_forward.1} parent=63 // loop_footer
                %s301 = sadd.s32 1, %s297
              $region70: #{scorer_forward.1} parent=63 // loop_footer_branch
                %296 = sbr.rel target = $region66
              $region71: #{scorer_forward.1} parent=63 // loop_exit
                _
            $region64: #{scorer_forward.1} parent=55 // pred_fallthru
              _
          $region56: #{scorer_forward.1} parent=51 // pred_fallthru
            _
          %339 = vnop
        $region52: #{scorer_forward.1} parent=47 // pred_fallthru
          _
      $region48: #{scorer_forward.1} parent=5 // pred_fallthru
        _
      %p340 = scmp.le.s32.totalorder 1, %s17
      %p341 = scmp.lt.s32.totalorder %s17, 3
      %p342 = pnand %p340, %p341
      %p343 = pneg %p342
      // Predicated region
      $region90: #{scorer_forward.1} parent=5 // pred_check
        _
      $region91: #{scorer_forward.1} parent=5 // pred_check_branch
        %345 = sbr.rel (%p342) target = $region93
      $region92: #{scorer_forward.1} parent=5 // pred_region
        %s346 = ssub.s32 %s17, 1
        %s347 = sand.u32 %s30, 1
        %s348 = sand.u32 %s30, 1
        %s349 = smul.addr %s348, 16
        %s350 = scalar_lea.vmem [#allocation3], %s349
        // Predicated region
        $region94: #{scorer_forward.1} parent=92 // pred_check
          %p351 = pneg %p43
        $region95: #{scorer_forward.1} parent=92 // pred_check_branch
          %353 = sbr.rel (%p351) target = $region97
        $region96: #{scorer_forward.1} parent=92 // pred_region
          _
        $region97: #{scorer_forward.1} parent=92 // pred_fallthru
          _
        %s354 = sand.u32 %s30, 1
        %s355 = sand.u32 %s30, 1
        %s356 = smul.addr %s355, 16
        %s357 = scalar_lea.vmem [#allocation3], %s356
        %p358 = pneg %p43
        %p359 = pneg %p40
        %p360 = pneg %p64
        %p361 = pneg %p61
        %p362 = pneg %p85
        %p363 = pneg %p82
        %p364 = pneg %p106
        %p365 = pneg %p103
        %p366 = pneg %p127
        %p367 = pneg %p124
        %p368 = pneg %p148
        %p369 = pneg %p145
        %p370 = pneg %p169
        %p371 = pneg %p166
        %p372 = pneg %p190
        %p373 = pneg %p187
        %p374 = pneg %p211
        %p375 = pneg %p208
        %p376 = pneg %p237
        %p377 = pneg %p234
        %p378 = scmp.lt.s32.totalorder %s22, 1
        %s379 = scalar_select %p378, %s22, 1
        %s380 = scalar_lea.vmem %s9, %s379
        %p381 = scmp.lt.s32.totalorder %s22, 1
        %s382 = scalar_select %p381, %s22, 1
        %s383 = scalar_lea.vmem %s9, %s382
        %v385 = vld [vmem:[%s350] sm:$0xf]
        %v386 = vld [vmem:[%s350 + $0x4] sm:$0xf]
        %v387 = vld [vmem:[%s350 + $0x8] sm:$0xf]
        %v388 = vld [vmem:[%s350 + $0xc] sm:$0xf]
        %v389 = vld [vmem:[%s1] sm:$0xf]
        %v390 = vld [vmem:[%s1 + $0x4] sm:$0xf]
        %v391 = vld [vmem:[%s1 + $0x8] sm:$0xf]
        %v392 = vld [vmem:[%s1 + $0xc] sm:$0xf]
        %v393 = vld [vmem:[%s1 + $0x10] sm:$0xf]
        %v394 = vld [vmem:[%s1 + $0x14] sm:$0xf]
        %v395 = vld [vmem:[%s1 + $0x18] sm:$0xf]
        %v396 = vld [vmem:[%s1 + $0x1c] sm:$0xf]
        %v397 = vld [vmem:[%s1 + $0x20] sm:$0xf]
        %v398 = vld [vmem:[%s1 + $0x24] sm:$0xf]
        %v399 = vld [vmem:[%s1 + $0x28] sm:$0xf]
        %v400 = vld [vmem:[%s1 + $0x2c] sm:$0xf]
        %v401 = vld [vmem:[%s1 + $0x30] sm:$0xf]
        %v402 = vld [vmem:[%s1 + $0x34] sm:$0xf]
        %v403 = vld [vmem:[%s1 + $0x38] sm:$0xf]
        %v404 = vld [vmem:[%s1 + $0x3c] sm:$0xf]
        %v405 = vld [vmem:[%s2] sm:$0xff]
        %v406 = vld [vmem:[%s2 + $0x8] sm:$0xff]
        %v407 = vld [vmem:[%s2 + $0x10] sm:$0xff]
        %v408 = vld [vmem:[%s2 + $0x18] sm:$0xff]
        %v409 = vld [vmem:[%s2 + $0x20] sm:$0xff]
        %v410 = vld [vmem:[%s2 + $0x28] sm:$0xff]
        %v411 = vld [vmem:[%s2 + $0x30] sm:$0xff]
        %v412 = vld [vmem:[%s2 + $0x38] sm:$0xff]
        %v413 = vld [vmem:[%s2 + $0x40] sm:$0xff]
        %v414 = vld [vmem:[%s2 + $0x48] sm:$0xff]
        %v415 = vld [vmem:[%s2 + $0x50] sm:$0xff]
        %v416 = vld [vmem:[%s2 + $0x58] sm:$0xff]
        %v417 = vld [vmem:[%s2 + $0x60] sm:$0xff]
        %v418 = vld [vmem:[%s2 + $0x68] sm:$0xff]
        %v419 = vld [vmem:[%s2 + $0x70] sm:$0xff]
        %v420 = vld [vmem:[%s2 + $0x78] sm:$0xff]
        %422 = vset.pattern.permute.xlu0 0
        %423 = vperm.xlu0 %422, %v405
        %v424 = vpop.permute.xlu0 %423
        %427 = vset.pattern.permute.xlu0 0
        %428 = vperm.xlu0 %427, %v406
        %v429 = vpop.permute.xlu0 %428
        %432 = vset.pattern.permute.xlu0 0
        %433 = vperm.xlu0 %432, %v407
        %v434 = vpop.permute.xlu0 %433
        %437 = vset.pattern.permute.xlu0 0
        %438 = vperm.xlu0 %437, %v408
        %v439 = vpop.permute.xlu0 %438
        %442 = vset.pattern.permute.xlu0 0
        %443 = vperm.xlu0 %442, %v409
        %v444 = vpop.permute.xlu0 %443
        %447 = vset.pattern.permute.xlu0 0
        %448 = vperm.xlu0 %447, %v410
        %v449 = vpop.permute.xlu0 %448
        %452 = vset.pattern.permute.xlu0 0
        %453 = vperm.xlu0 %452, %v411
        %v454 = vpop.permute.xlu0 %453
        %457 = vset.pattern.permute.xlu0 0
        %458 = vperm.xlu0 %457, %v412
        %v459 = vpop.permute.xlu0 %458
        %462 = vset.pattern.permute.xlu0 0
        %463 = vperm.xlu0 %462, %v413
        %v464 = vpop.permute.xlu0 %463
        %467 = vset.pattern.permute.xlu0 0
        %468 = vperm.xlu0 %467, %v414
        %v469 = vpop.permute.xlu0 %468
        %472 = vset.pattern.permute.xlu0 0
        %473 = vperm.xlu0 %472, %v415
        %v474 = vpop.permute.xlu0 %473
        %477 = vset.pattern.permute.xlu0 0
        %478 = vperm.xlu0 %477, %v416
        %v479 = vpop.permute.xlu0 %478
        %482 = vset.pattern.permute.xlu0 0
        %483 = vperm.xlu0 %482, %v417
        %v484 = vpop.permute.xlu0 %483
        %487 = vset.pattern.permute.xlu0 0
        %488 = vperm.xlu0 %487, %v418
        %v489 = vpop.permute.xlu0 %488
        %492 = vset.pattern.permute.xlu0 0
        %493 = vperm.xlu0 %492, %v419
        %v494 = vpop.permute.xlu0 %493
        %497 = vset.pattern.permute.xlu0 0
        %498 = vperm.xlu0 %497, %v420
        %v499 = vpop.permute.xlu0 %498
        %v517 = vunpack.c.l.b16 %v389
        %v518 = vunpack.c.l.b16 %v390
        %v519 = vunpack.c.l.b16 %v391
        %v520 = vunpack.c.l.b16 %v392
        %v521 = vunpack.c.l.b16 %v393
        %v522 = vunpack.c.l.b16 %v394
        %v523 = vunpack.c.l.b16 %v395
        %v524 = vunpack.c.l.b16 %v396
        %v525 = vunpack.c.l.b16 %v397
        %v526 = vunpack.c.l.b16 %v398
        %v527 = vunpack.c.l.b16 %v399
        %v528 = vunpack.c.l.b16 %v400
        %v529 = vunpack.c.l.b16 %v401
        %v530 = vunpack.c.l.b16 %v402
        %v531 = vunpack.c.l.b16 %v403
        %v532 = vunpack.c.l.b16 %v404
        %v533 = vpack.c.b16 %v518, %v517
        %v534 = vpack.c.b16 %v520, %v519
        %v535 = vpack.c.b16 %v522, %v521
        %v536 = vpack.c.b16 %v524, %v523
        %v537 = vpack.c.b16 %v526, %v525
        %v538 = vpack.c.b16 %v528, %v527
        %v539 = vpack.c.b16 %v530, %v529
        %v540 = vpack.c.b16 %v532, %v531
        %v545 = vunpack.c.l.b16 %v385
        %v546 = vunpack.c.l.b16 %v386
        %v547 = vunpack.c.l.b16 %v387
        %v548 = vunpack.c.l.b16 %v388
        %v549 = vpack.c.b16 %v546, %v545
        %v550 = vpack.c.b16 %v548, %v547
        %vm553 = vcmask 261120
        %v555 = vsel %vm553, %v533, 0
        %v558 = vsel %vm553, %v534, 0
        %v561 = vsel %vm553, %v535, 0
        %v564 = vsel %vm553, %v536, 0
        %v567 = vsel %vm553, %v537, 0
        %v570 = vsel %vm553, %v538, 0
        %v573 = vsel %vm553, %v539, 0
        %v576 = vsel %vm553, %v540, 0
        %578 = vmatprep.subr.bf16.mxu0 0
        %579 = vmatpush1.bf16.msra.mxu0 %v549
        %580 = vmatprep.subr.bf16.mxu0 0
        %581 = vmatpush1.bf16.msra.mxu0 %v550
        %582 = vmatprep.subr.bf16.mxu0 0
        %583 = vmatpush1.bf16.msra.mxu0 0
        %584 = vmatprep.subr.bf16.mxu0 0
        %585 = vmatpush1.bf16.msra.mxu0 0
        %586 = vmatprep.subr.bf16.mxu0 0
        %587 = vmatpush1.bf16.msra.mxu0 0
        %588 = vmatprep.subr.bf16.mxu0 0
        %589 = vmatpush1.bf16.msra.mxu0 0
        %590 = vmatprep.subr.bf16.mxu0 0
        %591 = vmatpush1.bf16.msra.mxu0 0
        %592 = vmatprep.subr.bf16.mxu0 0
        %593 = vmatpush1.bf16.msra.mxu0 0
        %594 = vmatprep.subr.bf16.mxu0 0
        %595 = vmatpush1.bf16.msra.mxu0 0
        %596 = vmatprep.subr.bf16.mxu0 0
        %597 = vmatpush1.bf16.msra.mxu0 0
        %598 = vmatprep.subr.bf16.mxu0 0
        %599 = vmatpush1.bf16.msra.mxu0 0
        %600 = vmatprep.subr.bf16.mxu0 0
        %601 = vmatpush1.bf16.msra.mxu0 0
        %602 = vmatprep.subr.bf16.mxu0 0
        %603 = vmatpush1.bf16.msra.mxu0 0
        %604 = vmatprep.subr.bf16.mxu0 0
        %605 = vmatpush1.bf16.msra.mxu0 0
        %606 = vmatprep.subr.bf16.mxu0 0
        %607 = vmatpush1.bf16.msra.mxu0 0
        %608 = vmatprep.subr.bf16.mxu0 0
        %609 = vmatpush1.bf16.msra.mxu0 0
        %610 = vmatprep.mubr.bf16.mxu0 0
        %611 = vmatmul.mubr.bf16.gmra.mrb[0].mxu0 %v555
        %v612 = vpop.f32.mrb[0].mxu0
        %v613 = vadd.f32 %v424, %v612
        %v614 = vpop.f32.mrb[0].mxu0
        %v615 = vpop.f32.mrb[0].mxu0
        %v616 = vadd.f32 %v429, %v615
        %v617 = vpop.f32.mrb[0].mxu0
        %618 = vmatprep.mubr.bf16.mxu0 0
        %619 = vmatmul.mubr.bf16.gmra.mrb[0].mxu0 %v558
        %v620 = vpop.f32.mrb[0].mxu0
        %v621 = vadd.f32 %v434, %v620
        %v622 = vpop.f32.mrb[0].mxu0
        %v623 = vpop.f32.mrb[0].mxu0
        %v624 = vadd.f32 %v439, %v623
        %v625 = vpop.f32.mrb[0].mxu0
        %626 = vmatprep.mubr.bf16.mxu0 0
        %627 = vmatmul.mubr.bf16.gmra.mrb[0].mxu0 %v561
        %v628 = vpop.f32.mrb[0].mxu0
        %v629 = vadd.f32 %v444, %v628
        %v630 = vpop.f32.mrb[0].mxu0
        %v631 = vpop.f32.mrb[0].mxu0
        %v632 = vadd.f32 %v449, %v631
        %v633 = vpop.f32.mrb[0].mxu0
        %634 = vmatprep.mubr.bf16.mxu0 0
        %635 = vmatmul.mubr.bf16.gmra.mrb[0].mxu0 %v564
        %v636 = vpop.f32.mrb[0].mxu0
        %v637 = vadd.f32 %v454, %v636
        %v638 = vpop.f32.mrb[0].mxu0
        %v639 = vpop.f32.mrb[0].mxu0
        %v640 = vadd.f32 %v459, %v639
        %v641 = vpop.f32.mrb[0].mxu0
        %642 = vmatprep.mubr.bf16.mxu0 0
        %643 = vmatmul.mubr.bf16.gmra.mrb[0].mxu0 %v567
        %v644 = vpop.f32.mrb[0].mxu0
        %v645 = vadd.f32 %v464, %v644
        %v646 = vpop.f32.mrb[0].mxu0
        %v647 = vpop.f32.mrb[0].mxu0
        %v648 = vadd.f32 %v469, %v647
        %v649 = vpop.f32.mrb[0].mxu0
        %650 = vmatprep.mubr.bf16.mxu0 0
        %651 = vmatmul.mubr.bf16.gmra.mrb[0].mxu0 %v570
        %v652 = vpop.f32.mrb[0].mxu0
        %v653 = vadd.f32 %v474, %v652
        %v654 = vpop.f32.mrb[0].mxu0
        %v655 = vpop.f32.mrb[0].mxu0
        %v656 = vadd.f32 %v479, %v655
        %v657 = vpop.f32.mrb[0].mxu0
        %658 = vmatprep.mubr.bf16.mxu0 0
        %659 = vmatmul.mubr.bf16.gmra.mrb[0].mxu0 %v573
        %v660 = vpop.f32.mrb[0].mxu0
        %v661 = vadd.f32 %v484, %v660
        %v662 = vpop.f32.mrb[0].mxu0
        %v663 = vpop.f32.mrb[0].mxu0
        %v664 = vadd.f32 %v489, %v663
        %v665 = vpop.f32.mrb[0].mxu0
        %666 = vmatprep.mubr.bf16.mxu0 0
        %667 = vmatmul.mubr.bf16.gmra.mrb[0].mxu0 %v576
        %v668 = vpop.f32.mrb[0].mxu0
        %v669 = vadd.f32 %v494, %v668
        %v670 = vpop.f32.mrb[0].mxu0
        %v671 = vpop.f32.mrb[0].mxu0
        %v672 = vadd.f32 %v499, %v671
        %v673 = vpop.f32.mrb[0].mxu0
        %674 = vdwg.mxu0
        %v675 = vxor.u32 %v613, 2147483648
        %v676 = vxor.u32 %v616, 2147483648
        %v677 = vxor.u32 %v621, 2147483648
        %v678 = vxor.u32 %v624, 2147483648
        %v679 = vxor.u32 %v629, 2147483648
        %v680 = vxor.u32 %v632, 2147483648
        %v681 = vxor.u32 %v637, 2147483648
        %v682 = vxor.u32 %v640, 2147483648
        %v683 = vxor.u32 %v645, 2147483648
        %v684 = vxor.u32 %v648, 2147483648
        %v685 = vxor.u32 %v653, 2147483648
        %v686 = vxor.u32 %v656, 2147483648
        %v687 = vxor.u32 %v661, 2147483648
        %v688 = vxor.u32 %v664, 2147483648
        %v689 = vxor.u32 %v669, 2147483648
        %v690 = vxor.u32 %v672, 2147483648
        %v691 = vmul.f32 %v675, 1.442695
        %v692 = vpow.pop %v691
        %v693 = vmul.f32 %v676, 1.442695
        %v694 = vpow.pop %v693
        %v695 = vmul.f32 %v677, 1.442695
        %v696 = vpow.pop %v695
        %v697 = vmul.f32 %v678, 1.442695
        %v698 = vpow.pop %v697
        %v699 = vmul.f32 %v679, 1.442695
        %v700 = vpow.pop %v699
        %v701 = vmul.f32 %v680, 1.442695
        %v702 = vpow.pop %v701
        %v703 = vmul.f32 %v681, 1.442695
        %v704 = vpow.pop %v703
        %v705 = vmul.f32 %v682, 1.442695
        %v706 = vpow.pop %v705
        %v707 = vmul.f32 %v683, 1.442695
        %v708 = vpow.pop %v707
        %v709 = vmul.f32 %v684, 1.442695
        %v710 = vpow.pop %v709
        %v711 = vmul.f32 %v685, 1.442695
        %v712 = vpow.pop %v711
        %v713 = vmul.f32 %v686, 1.442695
        %v714 = vpow.pop %v713
        %v715 = vmul.f32 %v687, 1.442695
        %v716 = vpow.pop %v715
        %v717 = vmul.f32 %v688, 1.442695
        %v718 = vpow.pop %v717
        %v719 = vmul.f32 %v689, 1.442695
        %v720 = vpow.pop %v719
        %v721 = vmul.f32 %v690, 1.442695
        %v722 = vpow.pop %v721
        %v723 = vadd.f32 %v692, 1.0
        %v724 = vadd.f32 %v694, 1.0
        %v725 = vadd.f32 %v696, 1.0
        %v726 = vadd.f32 %v698, 1.0
        %v727 = vadd.f32 %v700, 1.0
        %v728 = vadd.f32 %v702, 1.0
        %v729 = vadd.f32 %v704, 1.0
        %v730 = vadd.f32 %v706, 1.0
        %v731 = vadd.f32 %v708, 1.0
        %v732 = vadd.f32 %v710, 1.0
        %v733 = vadd.f32 %v712, 1.0
        %v734 = vadd.f32 %v714, 1.0
        %v735 = vadd.f32 %v716, 1.0
        %v736 = vadd.f32 %v718, 1.0
        %v737 = vadd.f32 %v720, 1.0
        %v738 = vadd.f32 %v722, 1.0
        %v739 = vrcp.pop %v723
        %v740 = vmul.f32 1.0, %v739
        %v741 = vrcp.pop %v724
        %v742 = vmul.f32 1.0, %v741
        %v743 = vrcp.pop %v725
        %v744 = vmul.f32 1.0, %v743
        %v745 = vrcp.pop %v726
        %v746 = vmul.f32 1.0, %v745
        %v747 = vrcp.pop %v727
        %v748 = vmul.f32 1.0, %v747
        %v749 = vrcp.pop %v728
        %v750 = vmul.f32 1.0, %v749
        %v751 = vrcp.pop %v729
        %v752 = vmul.f32 1.0, %v751
        %v753 = vrcp.pop %v730
        %v754 = vmul.f32 1.0, %v753
        %v755 = vrcp.pop %v731
        %v756 = vmul.f32 1.0, %v755
        %v757 = vrcp.pop %v732
        %v758 = vmul.f32 1.0, %v757
        %v759 = vrcp.pop %v733
        %v760 = vmul.f32 1.0, %v759
        %v761 = vrcp.pop %v734
        %v762 = vmul.f32 1.0, %v761
        %v763 = vrcp.pop %v735
        %v764 = vmul.f32 1.0, %v763
        %v765 = vrcp.pop %v736
        %v766 = vmul.f32 1.0, %v765
        %v767 = vrcp.pop %v737
        %v768 = vmul.f32 1.0, %v767
        %v769 = vrcp.pop %v738
        %v770 = vmul.f32 1.0, %v769
        %v771 = vmul.f32 %v613, %v740
        %v772 = vmul.f32 %v616, %v742
        %v773 = vmul.f32 %v621, %v744
        %v774 = vmul.f32 %v624, %v746
        %v775 = vmul.f32 %v629, %v748
        %v776 = vmul.f32 %v632, %v750
        %v777 = vmul.f32 %v637, %v752
        %v778 = vmul.f32 %v640, %v754
        %v779 = vmul.f32 %v645, %v756
        %v780 = vmul.f32 %v648, %v758
        %v781 = vmul.f32 %v653, %v760
        %v782 = vmul.f32 %v656, %v762
        %v783 = vmul.f32 %v661, %v764
        %v784 = vmul.f32 %v664, %v766
        %v785 = vmul.f32 %v669, %v768
        %v786 = vmul.f32 %v672, %v770
        %v787 = vpack.c.bf16 %v772, %v771
        %v788 = vpack.c.bf16 %v774, %v773
        %v789 = vpack.c.bf16 %v776, %v775
        %v790 = vpack.c.bf16 %v778, %v777
        %v791 = vpack.c.bf16 %v780, %v779
        %v792 = vpack.c.bf16 %v782, %v781
        %v793 = vpack.c.bf16 %v784, %v783
        %v794 = vpack.c.bf16 %v786, %v785
        %v795 = vld [vmem:[%s3] sm:$0xf]
        %v796 = vld [vmem:[%s3 + $0x4] sm:$0xf]
        %v797 = vld [vmem:[%s3 + $0x8] sm:$0xf]
        %v798 = vld [vmem:[%s3 + $0xc] sm:$0xf]
        %v799 = vld [vmem:[%s4] sm:$0xff]
        %v800 = vld [vmem:[%s4 + $0x8] sm:$0xff]
        %v801 = vld [vmem:[%s4 + $0x10] sm:$0xff]
        %v802 = vld [vmem:[%s4 + $0x18] sm:$0xff]
        %804 = vset.pattern.permute.xlu0 0
        %805 = vperm.xlu0 %804, %v799
        %v806 = vpop.permute.xlu0 %805
        %809 = vset.pattern.permute.xlu0 0
        %810 = vperm.xlu0 %809, %v800
        %v811 = vpop.permute.xlu0 %810
        %814 = vset.pattern.permute.xlu0 0
        %815 = vperm.xlu0 %814, %v801
        %v816 = vpop.permute.xlu0 %815
        %819 = vset.pattern.permute.xlu0 0
        %820 = vperm.xlu0 %819, %v802
        %v821 = vpop.permute.xlu0 %820
        %v827 = vunpack.c.l.b16 %v795
        %v828 = vunpack.c.l.b16 %v796
        %v829 = vunpack.c.l.b16 %v797
        %v830 = vunpack.c.l.b16 %v798
        %v831 = vpack.c.b16 %v828, %v827
        %v832 = vpack.c.b16 %v830, %v829
        %835 = vmatprep.subr.bf16.mxu0 0
        %836 = vmatpush1.bf16.msra.mxu0 %v787
        %837 = vmatprep.subr.bf16.mxu0 0
        %838 = vmatpush1.bf16.msra.mxu0 %v788
        %839 = vmatprep.subr.bf16.mxu0 0
        %840 = vmatpush1.bf16.msra.mxu0 %v789
        %841 = vmatprep.subr.bf16.mxu0 0
        %842 = vmatpush1.bf16.msra.mxu0 %v790
        %843 = vmatprep.subr.bf16.mxu0 0
        %844 = vmatpush1.bf16.msra.mxu0 %v791
        %845 = vmatprep.subr.bf16.mxu0 0
        %846 = vmatpush1.bf16.msra.mxu0 %v792
        %847 = vmatprep.subr.bf16.mxu0 0
        %848 = vmatpush1.bf16.msra.mxu0 %v793
        %849 = vmatprep.subr.bf16.mxu0 0
        %850 = vmatpush1.bf16.msra.mxu0 %v794
        %851 = vmatprep.subr.bf16.mxu0 0
        %852 = vmatpush1.bf16.msra.mxu0 0
        %853 = vmatprep.subr.bf16.mxu0 0
        %854 = vmatpush1.bf16.msra.mxu0 0
        %855 = vmatprep.subr.bf16.mxu0 0
        %856 = vmatpush1.bf16.msra.mxu0 0
        %857 = vmatprep.subr.bf16.mxu0 0
        %858 = vmatpush1.bf16.msra.mxu0 0
        %859 = vmatprep.subr.bf16.mxu0 0
        %860 = vmatpush1.bf16.msra.mxu0 0
        %861 = vmatprep.subr.bf16.mxu0 0
        %862 = vmatpush1.bf16.msra.mxu0 0
        %863 = vmatprep.subr.bf16.mxu0 0
        %864 = vmatpush1.bf16.msra.mxu0 0
        %865 = vmatprep.subr.bf16.mxu0 0
        %866 = vmatpush1.bf16.msra.mxu0 0
        %867 = vmatprep.mubr.bf16.mxu0 0
        %868 = vmatmul.mubr.bf16.gmra.mrb[0].mxu0 %v831
        %v869 = vpop.f32.mrb[0].mxu0
        %v870 = vadd.f32 %v806, %v869
        %v871 = vpop.f32.mrb[0].mxu0
        %v872 = vpop.f32.mrb[0].mxu0
        %v873 = vadd.f32 %v811, %v872
        %v874 = vpop.f32.mrb[0].mxu0
        %875 = vmatprep.mubr.bf16.mxu0 0
        %876 = vmatmul.mubr.bf16.gmra.mrb[0].mxu0 %v832
        %v877 = vpop.f32.mrb[0].mxu0
        %v878 = vadd.f32 %v816, %v877
        %v879 = vpop.f32.mrb[0].mxu0
        %v880 = vpop.f32.mrb[0].mxu0
        %v881 = vadd.f32 %v821, %v880
        %v882 = vpop.f32.mrb[0].mxu0
        %883 = vdwg.mxu0
        %v884 = vxor.u32 %v870, 2147483648
        %v885 = vxor.u32 %v873, 2147483648
        %v886 = vxor.u32 %v878, 2147483648
        %v887 = vxor.u32 %v881, 2147483648
        %v888 = vmul.f32 %v884, 1.442695
        %v889 = vpow.pop %v888
        %v890 = vmul.f32 %v885, 1.442695
        %v891 = vpow.pop %v890
        %v892 = vmul.f32 %v886, 1.442695
        %v893 = vpow.pop %v892
        %v894 = vmul.f32 %v887, 1.442695
        %v895 = vpow.pop %v894
        %v896 = vadd.f32 %v889, 1.0
        %v897 = vadd.f32 %v891, 1.0
        %v898 = vadd.f32 %v893, 1.0
        %v899 = vadd.f32 %v895, 1.0
        %v900 = vrcp.pop %v896
        %v901 = vmul.f32 1.0, %v900
        %v902 = vrcp.pop %v897
        %v903 = vmul.f32 1.0, %v902
        %v904 = vrcp.pop %v898
        %v905 = vmul.f32 1.0, %v904
        %v906 = vrcp.pop %v899
        %v907 = vmul.f32 1.0, %v906
        %v908 = vmul.f32 %v870, %v901
        %v909 = vmul.f32 %v873, %v903
        %v910 = vmul.f32 %v878, %v905
        %v911 = vmul.f32 %v881, %v907
        %v912 = vld [vmem:[%s5] sm:$0xff]
        %v913 = vld [vmem:[%s6] sm:$0xff]
        %915 = vset.pattern.permute.xlu0 0
        %916 = vperm.xlu0 %915, %v913
        %v917 = vpop.permute.xlu0 %916
        %v920 = vsel %vm553, %v912, 0
        %922 = vmatprep.subr.mxu0 0.0
        %923 = vmatpush1.msra.mxu0 %v908
        %924 = vmatprep.subr.mxu0 0.0
        %925 = vmatpush1.msra.mxu0 %v909
        %926 = vmatprep.subr.mxu0 0.0
        %927 = vmatpush1.msra.mxu0 %v910
        %928 = vmatprep.subr.mxu0 0.0
        %929 = vmatpush1.msra.mxu0 %v911
        %930 = vmatprep.subr.mxu0 0.0
        %931 = vmatpush1.msra.mxu0 0.0
        %932 = vmatprep.subr.mxu0 0.0
        %933 = vmatpush1.msra.mxu0 0.0
        %934 = vmatprep.subr.mxu0 0.0
        %935 = vmatpush1.msra.mxu0 0.0
        %936 = vmatprep.subr.mxu0 0.0
        %937 = vmatpush1.msra.mxu0 0.0
        %938 = vmatprep.subr.mxu0 0.0
        %939 = vmatpush1.msra.mxu0 0.0
        %940 = vmatprep.subr.mxu0 0.0
        %941 = vmatpush1.msra.mxu0 0.0
        %942 = vmatprep.subr.mxu0 0.0
        %943 = vmatpush1.msra.mxu0 0.0
        %944 = vmatprep.subr.mxu0 0.0
        %945 = vmatpush1.msra.mxu0 0.0
        %946 = vmatprep.subr.mxu0 0.0
        %947 = vmatpush1.msra.mxu0 0.0
        %948 = vmatprep.subr.mxu0 0.0
        %949 = vmatpush1.msra.mxu0 0.0
        %950 = vmatprep.subr.mxu0 0.0
        %951 = vmatpush1.msra.mxu0 0.0
        %952 = vmatprep.subr.mxu0 0.0
        %953 = vmatpush1.msra.mxu0 0.0
        %954 = vmatprep.subr.mxu0 0.0
        %955 = vmatpush1.msra.mxu0 0.0
        %956 = vmatprep.subr.mxu0 0.0
        %957 = vmatpush1.msra.mxu0 0.0
        %958 = vmatprep.subr.mxu0 0.0
        %959 = vmatpush1.msra.mxu0 0.0
        %960 = vmatprep.subr.mxu0 0.0
        %961 = vmatpush1.msra.mxu0 0.0
        %962 = vmatprep.subr.mxu0 0.0
        %963 = vmatpush1.msra.mxu0 0.0
        %964 = vmatprep.subr.mxu0 0.0
        %965 = vmatpush1.msra.mxu0 0.0
        %966 = vmatprep.subr.mxu0 0.0
        %967 = vmatpush1.msra.mxu0 0.0
        %968 = vmatprep.subr.mxu0 0.0
        %969 = vmatpush1.msra.mxu0 0.0
        %970 = vmatprep.subr.mxu0 0.0
        %971 = vmatpush1.msra.mxu0 0.0
        %972 = vmatprep.subr.mxu0 0.0
        %973 = vmatpush1.msra.mxu0 0.0
        %974 = vmatprep.subr.mxu0 0.0
        %975 = vmatpush1.msra.mxu0 0.0
        %976 = vmatprep.subr.mxu0 0.0
        %977 = vmatpush1.msra.mxu0 0.0
        %978 = vmatprep.subr.mxu0 0.0
        %979 = vmatpush1.msra.mxu0 0.0
        %980 = vmatprep.subr.mxu0 0.0
        %981 = vmatpush1.msra.mxu0 0.0
        %982 = vmatprep.subr.mxu0 0.0
        %983 = vmatpush1.msra.mxu0 0.0
        %984 = vmatprep.subr.mxu0 0.0
        %985 = vmatpush1.msra.mxu0 0.0
        %986 = vmatprep.mubr.f32.mxu0 0.0
        %987 = vmatmul.mubr.f32.gmra.mrb[0].mxu0 %v920
        %v988 = vpop.f32.mrb[0].mxu0
        %v989 = vadd.f32 %v917, %v988
        %v990 = vpop.f32.mrb[0].mxu0
        %991 = vdwg.mxu0
        %v992 = vxor.u32 %v989, 2147483648
        %v993 = vmul.f32 %v992, 1.442695
        %v994 = vpow.pop %v993
        %v995 = vadd.f32 %v994, 1.0
        %v996 = vrcp.pop %v995
        %v997 = vmul.f32 1.0, %v996
        %v998 = vmul.f32 %v989, %v997
        %v999 = vld [vmem:[%s7] sm:$0xff]
        %1001 = vset.pattern.permute.xlu0 0
        %1002 = vperm.xlu0 %1001, %v999
        %v1003 = vpop.permute.xlu0 %1002
        %v1005 = vmul.f32 %v998, %v1003
        %v1006 = vrot.slane %v1005, 4
        %v1007 = vadd.f32 %v1005, %v1006
        %v1008 = vrot.slane %v1007, 2
        %v1009 = vadd.f32 %v1007, %v1008
        %v1010 = vrot.slane %v1009, 1
        %v1011 = vadd.f32 %v1009, %v1010
        %v1012 = vld [vmem:[#allocation2] sm:$0x1]
        %1014 = vset.pattern.permute.xlu0 0
        %1015 = vperm.xlu0 %1014, %v1012
        %v1016 = vpop.permute.xlu0 %1015
        %v1018 = vlaneseq
        %v1019 = vshrl.u32 %v1018, 7
        %v1020 = vsub.s32 0, %v1019
        %v1021 = vrot.slane %v1016, %v1020
        %v1022 = vadd.f32 %v1011, %v1021
        %1023 = vst [vmem:[%s383] sm:$0x1] %v1022
        %p1024 = scmp.lt.s32.totalorder %s22, 1
        %s1025 = scalar_select %p1024, %s22, 1
        %s1026 = scalar_lea.vmem %s9, %s1025
        // Predicated region
        $region98: #{scorer_forward.1} parent=92 // pred_check
          %p1027 = pneg %p234
        $region99: #{scorer_forward.1} parent=92 // pred_check_branch
          %1029 = sbr.rel (%p1027) target = $region101
        $region100: #{scorer_forward.1} parent=92 // pred_region
          _
        $region101: #{scorer_forward.1} parent=92 // pred_fallthru
          _
      $region93: #{scorer_forward.1} parent=5 // pred_fallthru
        _
      %p1030 = scmp.le.s32.totalorder 2, %s17
      // Predicated region
      $region102: #{scorer_forward.1} parent=5 // pred_check
        %p1031 = pneg %p1030
      $region103: #{scorer_forward.1} parent=5 // pred_check_branch
        %1033 = sbr.rel (%p1031) target = $region105
      $region104: #{scorer_forward.1} parent=5 // pred_region
        %s1034 = ssub.s32 %s17, 2
        // Predicated region
        $region106: #{scorer_forward.1} parent=104 // pred_check
          %p1035 = pneg %p240
        $region107: #{scorer_forward.1} parent=104 // pred_check_branch
          %1037 = sbr.rel (%p1035) target = $region109
        $region108: #{scorer_forward.1} parent=104 // pred_region
          %p1038 = scmp.lt.s32.totalorder %s23, 1
          %s1039 = scalar_select %p1038, %s23, 1
          %s1040 = scalar_lea.vmem %s9, %s1039
        $region109: #{scorer_forward.1} parent=104 // pred_fallthru
          _
      $region105: #{scorer_forward.1} parent=5 // pred_fallthru
        _
    $region6: #{scorer_forward.1} parent=1 // loop_footer
      %s21 = sadd.s32 1, %s17
    $region7: #{scorer_forward.1} parent=1 // loop_footer_branch
      %16 = sbr.rel target = $region3
    $region8: #{scorer_forward.1} parent=1 // loop_exit
      _

</llo_original>
